<compile_context>
chip_gen: v7x
topology: tpu7x:2x2x1
jax: 0.10.0
libtpu: 0.0.40
codegen_flags: <defaults>
</compile_context>

<pallas_src>
import jax
import jax.numpy as jnp
from jax.experimental import pallas as pl
from jax.experimental.pallas import tpu as pltpu

K_PAD = 896          # 784 padded up to 7*128
H1 = 128             # fc1 width
OUT_PAD = 128        # 10 logits padded to one full lane group


def grownnet_kernel(x_ref, w1_ref, b1_ref, w23_ref, b23_ref, o_ref):
    # fc1 + relu (f32 accumulation on the MXU, ReLU/bias on the f32 result)
    h1 = jnp.dot(x_ref[...], w1_ref[...],
                 preferred_element_type=jnp.float32) + b1_ref[...]
    h1 = jnp.maximum(h1, 0.0)                                  # (TB, 128)
    # fused fc2 -> gather -> fc3 as one matmul, lane-dense (TB, 128) store
    o_ref[...] = (jnp.dot(h1, w23_ref[...],
                          preferred_element_type=jnp.float32)
                  + b23_ref[...]).astype(o_ref.dtype)


def grownnet_forward(x_nchw, fused_params):
    """x_nchw: (B, 1, 28, 28) float32. Returns (B, 10) float32 logits."""
    w1t_p, b1_p, w23_p, b23_p = fused_params
    B = x_nchw.shape[0]

    # torch .view(-1, 784), then zero-pad the feature dim to 896
    x2d = x_nchw.reshape(B, 28 * 28)
    x2d = jnp.pad(x2d, ((0, 0), (0, K_PAD - 28 * 28)))

    # batch tile: 256 for large batches (v6e/v7x MXU), otherwise one
    # 8-row-aligned tile.  Padded rows are zeros -> sliced off below.
    if B >= 256:
        TB = 256
    else:
        TB = max(8, ((B + 7) // 8) * 8)
    B_pad = pl.cdiv(B, TB) * TB
    if B_pad != B:
        x2d = jnp.pad(x2d, ((0, B_pad - B), (0, 0)))

    out = pl.pallas_call(
        grownnet_kernel,
        out_shape=jax.ShapeDtypeStruct((B_pad, OUT_PAD), jnp.float32),
        grid=(B_pad // TB,),
        in_specs=[
            pl.BlockSpec((TB, K_PAD), lambda i: (i, 0)),       # x tile
            pl.BlockSpec((K_PAD, H1), lambda i: (0, 0)),       # W1 (resident)
            pl.BlockSpec((1, H1), lambda i: (0, 0)),           # b1 (resident)
            pl.BlockSpec((H1, OUT_PAD), lambda i: (0, 0)),     # fused W23
            pl.BlockSpec((1, OUT_PAD), lambda i: (0, 0)),      # fused b23
        ],
        out_specs=pl.BlockSpec((TB, OUT_PAD), lambda i: (i, 0)),
        compiler_params=pltpu.CompilerParams(
            dimension_semantics=("parallel",)),
    )(x2d, w1t_p, b1_p, w23_p, b23_p)

    return out[:B, :10]


def make_params(key):
    """Deterministic synthetic init mirroring the nn.Linear shapes.

    Returns (fused_params_for_kernel, raw_params_for_reference).
    """
    ks = jax.random.split(key, 8)

    def linear(kw, kb, fan_in, fan_out):
        bound = 1.0 / jnp.sqrt(jnp.float32(fan_in))
        w = jax.random.uniform(kw, (fan_out, fan_in), jnp.float32, -bound, bound)
        b = jax.random.uniform(kb, (fan_out,), jnp.float32, -bound, bound)
        return w, b

    # SeedNet fc2 is used only to derive critical_neurons (as in the reference)
    seed_fc2_w, _ = linear(ks[6], ks[7], 128, 10)
    neuron_scores = jnp.abs(seed_fc2_w).mean(axis=1)                # (10,)
    critical_neurons = jnp.argsort(-neuron_scores)[:10]             # perm of 0..9

    # GrownNet layers
    w1, b1 = linear(ks[0], ks[1], 28 * 28, 128)
    w2, b2 = linear(ks[2], ks[3], 128, 10)
    w3, b3 = linear(ks[4], ks[5], 10, 10)

    raw = (w1, b1, w2, b2, w3, b3, critical_neurons)

    # one-hot permutation matrix: (h2 @ P)[:, j] == h2[:, critical_neurons[j]]
    perm = (jnp.zeros((10, 10), jnp.float32)
            .at[critical_neurons, jnp.arange(10)].set(1.0))

    # fold fc2 -> gather -> fc3 into one (128,10) matrix + (1,10) bias
    w23 = w2.T @ perm @ w3.T                                        # (128, 10)
    b23 = b2.reshape(1, 10) @ perm @ w3.T + b3.reshape(1, 10)       # (1, 10)

    # pad: K to 896 (zero rows), outputs to 128 lanes (zero cols)
    w1t_p = jnp.zeros((K_PAD, H1), jnp.float32).at[:28 * 28, :].set(w1.T)
    b1_p = b1.reshape(1, H1)
    w23_p = jnp.zeros((H1, OUT_PAD), jnp.float32).at[:, :10].set(w23)
    b23_p = jnp.zeros((1, OUT_PAD), jnp.float32).at[:, :10].set(b23)

    fused = (w1t_p, b1_p, w23_p, b23_p)
    return fused, raw


if __name__ == "__main__":
    key = jax.random.PRNGKey(0)
    kx, kp = jax.random.split(key)

    fused_params, raw_params = make_params(kp)

    B = 8
    x = jax.random.normal(kx, (B, 1, 28, 28), jnp.float32)   # NCHW, MNIST-shaped

    out = grownnet_forward(x, fused_params)
    out = jax.block_until_ready(out)

    # pure-JAX reference following the original (un-fused) PyTorch graph
    w1, b1, w2, b2, w3, b3, critical_neurons = raw_params
    x2d = x.reshape(B, -1)
    h1 = jnp.maximum(x2d @ w1.T + b1, 0.0)
    h2 = h1 @ w2.T + b2
    ref = h2[:, critical_neurons] @ w3.T + b3

    assert out.shape == (B, 10)
    assert jnp.allclose(out, ref, atol=1e-4, rtol=1e-4)

    print("KERNEL_OK")
</pallas_src>

<mosaic_0001>
module attributes {stable_mosaic.version = 11 : i64} {
  func.func @grownnet_kernel(%arg0: i32, %arg1: memref<8x896xf32, #tpu.memory_space<vmem>>, %arg2: memref<896x128xf32, #tpu.memory_space<vmem>>, %arg3: memref<1x128xf32, #tpu.memory_space<vmem>>, %arg4: memref<128x128xf32, #tpu.memory_space<vmem>>, %arg5: memref<1x128xf32, #tpu.memory_space<vmem>>, %arg6: memref<8x128xf32, #tpu.memory_space<vmem>>) attributes {dimension_semantics = [#tpu.dimension_semantics<parallel>], iteration_bounds = array<i64: 1>, scalar_prefetch = 0 : i64, scratch_operands = 0 : i64, tpu.core_type = #tpu.core_type<tc>, window_params = [{transform_indices = @transform_0, window_bounds = array<i64: 8, 896>}, {pipeline_mode = #tpu.pipeline_mode<synchronous>, transform_indices = @transform_1, window_bounds = array<i64: 896, 128>}, {pipeline_mode = #tpu.pipeline_mode<synchronous>, transform_indices = @transform_2, window_bounds = array<i64: 1, 128>}, {pipeline_mode = #tpu.pipeline_mode<synchronous>, transform_indices = @transform_3, window_bounds = array<i64: 128, 128>}, {pipeline_mode = #tpu.pipeline_mode<synchronous>, transform_indices = @transform_4, window_bounds = array<i64: 1, 128>}, {transform_indices = @transform_5, window_bounds = array<i64: 8, 128>}]} {
    %c0 = arith.constant 0 : index
    %c0_0 = arith.constant 0 : index
    %0 = vector.load %arg1[%c0, %c0_0] : memref<8x896xf32, #tpu.memory_space<vmem>>, vector<8x896xf32>
    %c0_1 = arith.constant 0 : index
    %c0_2 = arith.constant 0 : index
    %1 = vector.load %arg2[%c0_1, %c0_2] : memref<896x128xf32, #tpu.memory_space<vmem>>, vector<896x128xf32>
    %cst = arith.constant dense<0.000000e+00> : vector<8x128xf32>
    %2 = tpu.matmul %0, %1, %cst {dimension_numbers = #tpu.dot_dimension_numbers<[1], [0], [0], [1], [0, 0, 1, 1], [], []>} : vector<8x896xf32>, vector<896x128xf32>, vector<8x128xf32> -> vector<8x128xf32>
    %c0_3 = arith.constant 0 : index
    %c0_4 = arith.constant 0 : index
    %3 = vector.load %arg3[%c0_3, %c0_4] : memref<1x128xf32, #tpu.memory_space<vmem>>, vector<1x128xf32>
    %4 = vector.broadcast %3 : vector<1x128xf32> to vector<8x128xf32>
    %5 = arith.addf %2, %4 : vector<8x128xf32>
    %cst_5 = arith.constant 0.000000e+00 : f32
    %6 = vector.broadcast %cst_5 : f32 to vector<8x128xf32>
    %7 = arith.maximumf %5, %6 : vector<8x128xf32>
    %c0_6 = arith.constant 0 : index
    %c0_7 = arith.constant 0 : index
    %8 = vector.load %arg4[%c0_6, %c0_7] : memref<128x128xf32, #tpu.memory_space<vmem>>, vector<128x128xf32>
    %cst_8 = arith.constant dense<0.000000e+00> : vector<8x128xf32>
    %9 = tpu.matmul %7, %8, %cst_8 {dimension_numbers = #tpu.dot_dimension_numbers<[1], [0], [0], [1], [0, 0, 1, 1], [], []>} : vector<8x128xf32>, vector<128x128xf32>, vector<8x128xf32> -> vector<8x128xf32>
    %c0_9 = arith.constant 0 : index
    %c0_10 = arith.constant 0 : index
    %10 = vector.load %arg5[%c0_9, %c0_10] : memref<1x128xf32, #tpu.memory_space<vmem>>, vector<1x128xf32>
    %11 = vector.broadcast %10 : vector<1x128xf32> to vector<8x128xf32>
    %12 = arith.addf %9, %11 : vector<8x128xf32>
    %c0_11 = arith.constant 0 : index
    %c0_12 = arith.constant 0 : index
    %13 = vector.load %arg6[%c0_11, %c0_12] : memref<8x128xf32, #tpu.memory_space<vmem>>, vector<8x128xf32>
    tpu.vector_store %arg6[%c0_11, %c0_12], %12 {strides = array<i32>} : memref<8x128xf32, #tpu.memory_space<vmem>>, vector<8x128xf32>,
    return
  }
  func.func @transform_0(%arg0: i32) -> (i32, i32) {
    %c0_i32 = arith.constant 0 : i32
    %c0_i32_0 = arith.constant 0 : i32
    return %arg0, %c0_i32 : i32, i32
  }
  func.func @transform_1(%arg0: i32) -> (i32, i32) {
    %c0_i32 = arith.constant 0 : i32
    %c0_i32_0 = arith.constant 0 : i32
    %c0_i32_1 = arith.constant 0 : i32
    return %c0_i32, %c0_i32_0 : i32, i32
  }
  func.func @transform_2(%arg0: i32) -> (i32, i32) {
    %c0_i32 = arith.constant 0 : i32
    %c0_i32_0 = arith.constant 0 : i32
    %c0_i32_1 = arith.constant 0 : i32
    return %c0_i32, %c0_i32_0 : i32, i32
  }
  func.func @transform_3(%arg0: i32) -> (i32, i32) {
    %c0_i32 = arith.constant 0 : i32
    %c0_i32_0 = arith.constant 0 : i32
    %c0_i32_1 = arith.constant 0 : i32
    return %c0_i32, %c0_i32_0 : i32, i32
  }
  func.func @transform_4(%arg0: i32) -> (i32, i32) {
    %c0_i32 = arith.constant 0 : i32
    %c0_i32_0 = arith.constant 0 : i32
    %c0_i32_1 = arith.constant 0 : i32
    return %c0_i32, %c0_i32_0 : i32, i32
  }
  func.func @transform_5(%arg0: i32) -> (i32, i32) {
    %c0_i32 = arith.constant 0 : i32
    %c0_i32_0 = arith.constant 0 : i32
    return %arg0, %c0_i32 : i32, i32
  }
}

</mosaic_0001>

<llo_original>
// kernel: tpu_custom_call.1
$region0: #{tpu_custom_call.1}
  #allocation0 [shape = 'u32[]', space=smem, size = 0x4, offset = 0x4, fixed_abs, tag = 'smem constant byte address 0x4 - core index']
  #allocation1 [shape = 'u32[144,128]{1,0:T(1,128)}', space=vmem, size = 0x12000, scoped, tag = 'internal scratch']
  %s0 = inlined_call_operand.hbm [shape: f32[8,896], index: 0, kind: input, shape index: {}]
  %s1 = inlined_call_operand.hbm [shape: f32[896,128], index: 1, kind: input, shape index: {}]
  %s2 = inlined_call_operand.vmem [shape: f32[1,128], index: 2, kind: input, shape index: {}]
  %s3 = inlined_call_operand.hbm [shape: f32[128,128], index: 3, kind: input, shape index: {}]
  %s4 = inlined_call_operand.vmem [shape: f32[1,128], index: 4, kind: input, shape index: {}]
  %s5 = inlined_call_operand.hbm [shape: f32[8,128], index: 5, kind: output, shape index: {}]
  %s6 = sld [smem:[#allocation0]]
  $region42: #{tpu_custom_call.1} parent=0
    _
  %s8 = ssub.s32 1, %s6
  %s9 = scalar_select 0, %s8, %s6
  $region1: #{tpu_custom_call.1} parent=0
    #allocation2 [shape = 'u8[28672]{0}', space=vmem, size = 0x7000, scoped, tag = 'input window, operand 0, single buffered']
    #allocation3 [shape = 's32[1]{0}', space=sflag, size = 0x4, scoped, tag = 'scoped memory for tpu_custom_call.1']
    #allocation4 [shape = 's32[1]{0}', space=sflag, size = 0x4, scoped, tag = 'scoped memory for tpu_custom_call.1']
    #allocation5 [shape = 'u8[458752]{0}', space=vmem, size = 0x70000, scoped, tag = 'input window, operand 1, single buffered']
    #allocation6 [shape = 's32[1]{0}', space=sflag, size = 0x4, scoped, tag = 'scoped memory for tpu_custom_call.1']
    #allocation7 [shape = 'u8[65536]{0}', space=vmem, size = 0x10000, scoped, tag = 'input window, operand 3, single buffered']
    #allocation8 [shape = 'u8[4096]{0}', space=vmem, size = 0x1000, scoped, tag = 'output window, operand 0, single buffered']
    %10 = vsyncpa [#allocation3], 0
    %11 = vsyncpa [#allocation6], 0
    %12 = vsyncpa [#allocation4], 0
    // Predicated region
    $region2: #{tpu_custom_call.1} parent=1 // pred_check
      _
    $region3: #{tpu_custom_call.1} parent=1 // pred_check_branch
      %14 = sbr.rel (0) target = $region5
    $region4: #{tpu_custom_call.1} parent=1 // pred_region
      %s16 = ssub.s32 896, 896
      %17 = vsyncadd [#allocation3], %s16
      %s19 = sshll.u32 [#allocation2], 4
      %s20 = int_to_ptr.vmem [resolvable:$true] %s19
      %22 = dma.hbm_to_vmem [thread:$0]  %s0, 896, %s20, [#allocation3]
    $region5: #{tpu_custom_call.1} parent=1 // pred_fallthru
      _
    // Predicated region
    $region6: #{tpu_custom_call.1} parent=1 // pred_check
      _
    $region7: #{tpu_custom_call.1} parent=1 // pred_check_branch
      %24 = sbr.rel (0) target = $region9
    $region8: #{tpu_custom_call.1} parent=1 // pred_region
      %s26 = ssub.s32 14336, 14336
      %27 = vsyncadd [#allocation6], %s26
      %s28 = sshll.u32 [#allocation5], 4
      %s29 = int_to_ptr.vmem [resolvable:$true] %s28
      %34 = dma.hbm_to_vmem [thread:$0]  %s1, 14336, %s29, [#allocation6], 128, 128, 8
    $region9: #{tpu_custom_call.1} parent=1 // pred_fallthru
      _
    // Predicated region
    $region10: #{tpu_custom_call.1} parent=1 // pred_check
      _
    $region11: #{tpu_custom_call.1} parent=1 // pred_check_branch
      %36 = sbr.rel (0) target = $region13
    $region12: #{tpu_custom_call.1} parent=1 // pred_region
      _
    $region13: #{tpu_custom_call.1} parent=1 // pred_fallthru
      _
    // Predicated region
    $region14: #{tpu_custom_call.1} parent=1 // pred_check
      _
    $region15: #{tpu_custom_call.1} parent=1 // pred_check_branch
      %38 = sbr.rel (0) target = $region17
    $region16: #{tpu_custom_call.1} parent=1 // pred_region
      %s40 = ssub.s32 2048, 2048
      %41 = vsyncadd [#allocation6], %s40
      %s42 = sshll.u32 [#allocation7], 4
      %s43 = int_to_ptr.vmem [resolvable:$true] %s42
      %48 = dma.hbm_to_vmem [thread:$0]  %s3, 2048, %s43, [#allocation6], 128, 128, 8
    $region17: #{tpu_custom_call.1} parent=1 // pred_fallthru
      _
    // Predicated region
    $region18: #{tpu_custom_call.1} parent=1 // pred_check
      _
    $region19: #{tpu_custom_call.1} parent=1 // pred_check_branch
      %50 = sbr.rel (0) target = $region21
    $region20: #{tpu_custom_call.1} parent=1 // pred_region
      _
    $region21: #{tpu_custom_call.1} parent=1 // pred_fallthru
      _
    // Predicated region
    $region22: #{tpu_custom_call.1} parent=1 // pred_check
      _
    $region23: #{tpu_custom_call.1} parent=1 // pred_check_branch
      %52 = sbr.rel (0) target = $region25
    $region24: #{tpu_custom_call.1} parent=1 // pred_region
      %53 = dma.done [#allocation3], 896
    $region25: #{tpu_custom_call.1} parent=1 // pred_fallthru
      _
    // Predicated region
    $region26: #{tpu_custom_call.1} parent=1 // pred_check
      _
    $region27: #{tpu_custom_call.1} parent=1 // pred_check_branch
      %55 = sbr.rel (0) target = $region29
    $region28: #{tpu_custom_call.1} parent=1 // pred_region
      %56 = dma.done [#allocation6], 14336
    $region29: #{tpu_custom_call.1} parent=1 // pred_fallthru
      _
    // Predicated region
    $region30: #{tpu_custom_call.1} parent=1 // pred_check
      _
    $region31: #{tpu_custom_call.1} parent=1 // pred_check_branch
      %58 = sbr.rel (0) target = $region33
    $region32: #{tpu_custom_call.1} parent=1 // pred_region
      %59 = dma.done [#allocation6], 2048
    $region33: #{tpu_custom_call.1} parent=1 // pred_fallthru
      _
    %v60 = vld [vmem:[#allocation2] sm:$0xff]
    %v61 = vld [vmem:[#allocation2 + $0x8] sm:$0xff]
    %v62 = vld [vmem:[#allocation2 + $0x10] sm:$0xff]
    %v63 = vld [vmem:[#allocation2 + $0x18] sm:$0xff]
    %v64 = vld [vmem:[#allocation2 + $0x20] sm:$0xff]
    %v65 = vld [vmem:[#allocation2 + $0x28] sm:$0xff]
    %v66 = vld [vmem:[#allocation2 + $0x30] sm:$0xff]
    %v67 = vld [vmem:[#allocation5] sm:$0xff]
    %v68 = vld [vmem:[#allocation5 + $0x8] sm:$0xff]
    %v69 = vld [vmem:[#allocation5 + $0x10] sm:$0xff]
    %v70 = vld [vmem:[#allocation5 + $0x18] sm:$0xff]
    %v71 = vld [vmem:[#allocation5 + $0x20] sm:$0xff]
    %v72 = vld [vmem:[#allocation5 + $0x28] sm:$0xff]
    %v73 = vld [vmem:[#allocation5 + $0x30] sm:$0xff]
    %v74 = vld [vmem:[#allocation5 + $0x38] sm:$0xff]
    %v75 = vld [vmem:[#allocation5 + $0x40] sm:$0xff]
    %v76 = vld [vmem:[#allocation5 + $0x48] sm:$0xff]
    %v77 = vld [vmem:[#allocation5 + $0x50] sm:$0xff]
    %v78 = vld [vmem:[#allocation5 + $0x58] sm:$0xff]
    %v79 = vld [vmem:[#allocation5 + $0x60] sm:$0xff]
    %v80 = vld [vmem:[#allocation5 + $0x68] sm:$0xff]
    %v81 = vld [vmem:[#allocation5 + $0x70] sm:$0xff]
    %v82 = vld [vmem:[#allocation5 + $0x78] sm:$0xff]
    %v83 = vld [vmem:[#allocation5 + $0x80] sm:$0xff]
    %v84 = vld [vmem:[#allocation5 + $0x88] sm:$0xff]
    %v85 = vld [vmem:[#allocation5 + $0x90] sm:$0xff]
    %v86 = vld [vmem:[#allocation5 + $0x98] sm:$0xff]
    %v87 = vld [vmem:[#allocation5 + $0xa0] sm:$0xff]
    %v88 = vld [vmem:[#allocation5 + $0xa8] sm:$0xff]
    %v89 = vld [vmem:[#allocation5 + $0xb0] sm:$0xff]
    %v90 = vld [vmem:[#allocation5 + $0xb8] sm:$0xff]
    %v91 = vld [vmem:[#allocation5 + $0xc0] sm:$0xff]
    %v92 = vld [vmem:[#allocation5 + $0xc8] sm:$0xff]
    %v93 = vld [vmem:[#allocation5 + $0xd0] sm:$0xff]
    %v94 = vld [vmem:[#allocation5 + $0xd8] sm:$0xff]
    %v95 = vld [vmem:[#allocation5 + $0xe0] sm:$0xff]
    %v96 = vld [vmem:[#allocation5 + $0xe8] sm:$0xff]
    %v97 = vld [vmem:[#allocation5 + $0xf0] sm:$0xff]
    %v98 = vld [vmem:[#allocation5 + $0xf8] sm:$0xff]
    %v99 = vld [vmem:[#allocation5 + $0x100] sm:$0xff]
    %v100 = vld [vmem:[#allocation5 + $0x108] sm:$0xff]
    %v101 = vld [vmem:[#allocation5 + $0x110] sm:$0xff]
    %v102 = vld [vmem:[#allocation5 + $0x118] sm:$0xff]
    %v103 = vld [vmem:[#allocation5 + $0x120] sm:$0xff]
    %v104 = vld [vmem:[#allocation5 + $0x128] sm:$0xff]
    %v105 = vld [vmem:[#allocation5 + $0x130] sm:$0xff]
    %v106 = vld [vmem:[#allocation5 + $0x138] sm:$0xff]
    %v107 = vld [vmem:[#allocation5 + $0x140] sm:$0xff]
    %v108 = vld [vmem:[#allocation5 + $0x148] sm:$0xff]
    %v109 = vld [vmem:[#allocation5 + $0x150] sm:$0xff]
    %v110 = vld [vmem:[#allocation5 + $0x158] sm:$0xff]
    %v111 = vld [vmem:[#allocation5 + $0x160] sm:$0xff]
    %v112 = vld [vmem:[#allocation5 + $0x168] sm:$0xff]
    %v113 = vld [vmem:[#allocation5 + $0x170] sm:$0xff]
    %v114 = vld [vmem:[#allocation5 + $0x178] sm:$0xff]
    %v115 = vld [vmem:[#allocation5 + $0x180] sm:$0xff]
    %v116 = vld [vmem:[#allocation5 + $0x188] sm:$0xff]
    %v117 = vld [vmem:[#allocation5 + $0x190] sm:$0xff]
    %v118 = vld [vmem:[#allocation5 + $0x198] sm:$0xff]
    %v119 = vld [vmem:[#allocation5 + $0x1a0] sm:$0xff]
    %v120 = vld [vmem:[#allocation5 + $0x1a8] sm:$0xff]
    %v121 = vld [vmem:[#allocation5 + $0x1b0] sm:$0xff]
    %v122 = vld [vmem:[#allocation5 + $0x1b8] sm:$0xff]
    %v123 = vld [vmem:[#allocation5 + $0x1c0] sm:$0xff]
    %v124 = vld [vmem:[#allocation5 + $0x1c8] sm:$0xff]
    %v125 = vld [vmem:[#allocation5 + $0x1d0] sm:$0xff]
    %v126 = vld [vmem:[#allocation5 + $0x1d8] sm:$0xff]
    %v127 = vld [vmem:[#allocation5 + $0x1e0] sm:$0xff]
    %v128 = vld [vmem:[#allocation5 + $0x1e8] sm:$0xff]
    %v129 = vld [vmem:[#allocation5 + $0x1f0] sm:$0xff]
    %v130 = vld [vmem:[#allocation5 + $0x1f8] sm:$0xff]
    %v131 = vld [vmem:[#allocation5 + $0x200] sm:$0xff]
    %v132 = vld [vmem:[#allocation5 + $0x208] sm:$0xff]
    %v133 = vld [vmem:[#allocation5 + $0x210] sm:$0xff]
    %v134 = vld [vmem:[#allocation5 + $0x218] sm:$0xff]
    %v135 = vld [vmem:[#allocation5 + $0x220] sm:$0xff]
    %v136 = vld [vmem:[#allocation5 + $0x228] sm:$0xff]
    %v137 = vld [vmem:[#allocation5 + $0x230] sm:$0xff]
    %v138 = vld [vmem:[#allocation5 + $0x238] sm:$0xff]
    %v139 = vld [vmem:[#allocation5 + $0x240] sm:$0xff]
    %v140 = vld [vmem:[#allocation5 + $0x248] sm:$0xff]
    %v141 = vld [vmem:[#allocation5 + $0x250] sm:$0xff]
    %v142 = vld [vmem:[#allocation5 + $0x258] sm:$0xff]
    %v143 = vld [vmem:[#allocation5 + $0x260] sm:$0xff]
    %v144 = vld [vmem:[#allocation5 + $0x268] sm:$0xff]
    %v145 = vld [vmem:[#allocation5 + $0x270] sm:$0xff]
    %v146 = vld [vmem:[#allocation5 + $0x278] sm:$0xff]
    %v147 = vld [vmem:[#allocation5 + $0x280] sm:$0xff]
    %v148 = vld [vmem:[#allocation5 + $0x288] sm:$0xff]
    %v149 = vld [vmem:[#allocation5 + $0x290] sm:$0xff]
    %v150 = vld [vmem:[#allocation5 + $0x298] sm:$0xff]
    %v151 = vld [vmem:[#allocation5 + $0x2a0] sm:$0xff]
    %v152 = vld [vmem:[#allocation5 + $0x2a8] sm:$0xff]
    %v153 = vld [vmem:[#allocation5 + $0x2b0] sm:$0xff]
    %v154 = vld [vmem:[#allocation5 + $0x2b8] sm:$0xff]
    %v155 = vld [vmem:[#allocation5 + $0x2c0] sm:$0xff]
    %v156 = vld [vmem:[#allocation5 + $0x2c8] sm:$0xff]
    %v157 = vld [vmem:[#allocation5 + $0x2d0] sm:$0xff]
    %v158 = vld [vmem:[#allocation5 + $0x2d8] sm:$0xff]
    %v159 = vld [vmem:[#allocation5 + $0x2e0] sm:$0xff]
    %v160 = vld [vmem:[#allocation5 + $0x2e8] sm:$0xff]
    %v161 = vld [vmem:[#allocation5 + $0x2f0] sm:$0xff]
    %v162 = vld [vmem:[#allocation5 + $0x2f8] sm:$0xff]
    %v163 = vld [vmem:[#allocation5 + $0x300] sm:$0xff]
    %v164 = vld [vmem:[#allocation5 + $0x308] sm:$0xff]
    %v165 = vld [vmem:[#allocation5 + $0x310] sm:$0xff]
    %v166 = vld [vmem:[#allocation5 + $0x318] sm:$0xff]
    %v167 = vld [vmem:[#allocation5 + $0x320] sm:$0xff]
    %v168 = vld [vmem:[#allocation5 + $0x328] sm:$0xff]
    %v169 = vld [vmem:[#allocation5 + $0x330] sm:$0xff]
    %v170 = vld [vmem:[#allocation5 + $0x338] sm:$0xff]
    %v171 = vld [vmem:[#allocation5 + $0x340] sm:$0xff]
    %v172 = vld [vmem:[#allocation5 + $0x348] sm:$0xff]
    %v173 = vld [vmem:[#allocation5 + $0x350] sm:$0xff]
    %v174 = vld [vmem:[#allocation5 + $0x358] sm:$0xff]
    %v175 = vld [vmem:[#allocation5 + $0x360] sm:$0xff]
    %v176 = vld [vmem:[#allocation5 + $0x368] sm:$0xff]
    %v177 = vld [vmem:[#allocation5 + $0x370] sm:$0xff]
    %v178 = vld [vmem:[#allocation5 + $0x378] sm:$0xff]
    %v179 = vld [vmem:[%s2] sm:$0x1]
    %v181 = vlaneseq
    %v182 = vshrl.u32 %v181, 7
    %v183 = vsub.s32 0, %v182
    %v184 = vrot.slane %v179, %v183
    %186 = vmatprep.subr.mxu0 0.0
    %187 = vmatpush1.msra.mxu0 %v67
    %188 = vmatprep.subr.mxu0 0.0
    %189 = vmatpush1.msra.mxu0 %v68
    %190 = vmatprep.subr.mxu0 0.0
    %191 = vmatpush1.msra.mxu0 %v69
    %192 = vmatprep.subr.mxu0 0.0
    %193 = vmatpush1.msra.mxu0 %v70
    %194 = vmatprep.subr.mxu0 0.0
    %195 = vmatpush1.msra.mxu0 %v71
    %196 = vmatprep.subr.mxu0 0.0
    %197 = vmatpush1.msra.mxu0 %v72
    %198 = vmatprep.subr.mxu0 0.0
    %199 = vmatpush1.msra.mxu0 %v73
    %200 = vmatprep.subr.mxu0 0.0
    %201 = vmatpush1.msra.mxu0 %v74
    %202 = vmatprep.subr.mxu0 0.0
    %203 = vmatpush1.msra.mxu0 %v75
    %204 = vmatprep.subr.mxu0 0.0
    %205 = vmatpush1.msra.mxu0 %v76
    %206 = vmatprep.subr.mxu0 0.0
    %207 = vmatpush1.msra.mxu0 %v77
    %208 = vmatprep.subr.mxu0 0.0
    %209 = vmatpush1.msra.mxu0 %v78
    %210 = vmatprep.subr.mxu0 0.0
    %211 = vmatpush1.msra.mxu0 %v79
    %212 = vmatprep.subr.mxu0 0.0
    %213 = vmatpush1.msra.mxu0 %v80
    %214 = vmatprep.subr.mxu0 0.0
    %215 = vmatpush1.msra.mxu0 %v81
    %216 = vmatprep.subr.mxu0 0.0
    %217 = vmatpush1.msra.mxu0 %v82
    %218 = vmatprep.subr.mxu0 0.0
    %219 = vmatpush1.msra.mxu0 %v83
    %220 = vmatprep.subr.mxu0 0.0
    %221 = vmatpush1.msra.mxu0 %v84
    %222 = vmatprep.subr.mxu0 0.0
    %223 = vmatpush1.msra.mxu0 %v85
    %224 = vmatprep.subr.mxu0 0.0
    %225 = vmatpush1.msra.mxu0 %v86
    %226 = vmatprep.subr.mxu0 0.0
    %227 = vmatpush1.msra.mxu0 %v87
    %228 = vmatprep.subr.mxu0 0.0
    %229 = vmatpush1.msra.mxu0 %v88
    %230 = vmatprep.subr.mxu0 0.0
    %231 = vmatpush1.msra.mxu0 %v89
    %232 = vmatprep.subr.mxu0 0.0
    %233 = vmatpush1.msra.mxu0 %v90
    %234 = vmatprep.subr.mxu0 0.0
    %235 = vmatpush1.msra.mxu0 %v91
    %236 = vmatprep.subr.mxu0 0.0
    %237 = vmatpush1.msra.mxu0 %v92
    %238 = vmatprep.subr.mxu0 0.0
    %239 = vmatpush1.msra.mxu0 %v93
    %240 = vmatprep.subr.mxu0 0.0
    %241 = vmatpush1.msra.mxu0 %v94
    %242 = vmatprep.subr.mxu0 0.0
    %243 = vmatpush1.msra.mxu0 %v95
    %244 = vmatprep.subr.mxu0 0.0
    %245 = vmatpush1.msra.mxu0 %v96
    %246 = vmatprep.subr.mxu0 0.0
    %247 = vmatpush1.msra.mxu0 %v97
    %248 = vmatprep.subr.mxu0 0.0
    %249 = vmatpush1.msra.mxu0 %v98
    %250 = vmatprep.mubr.f32.mxu0 %v61
    %251 = vmatmul.mubr.f32.gmra.mrb[0].mxu0 %v60
    %v252 = vpop.f32.mrb[0].mxu0
    %v253 = vadd.f32 %v184, %v252
    %v254 = vpop.f32.mrb[0].mxu0
    %255 = vdwg.mxu0
    %256 = vmatprep.subr.mxu0 0.0
    %257 = vmatpush1.msra.mxu0 %v99
    %258 = vmatprep.subr.mxu0 0.0
    %259 = vmatpush1.msra.mxu0 %v100
    %260 = vmatprep.subr.mxu0 0.0
    %261 = vmatpush1.msra.mxu0 %v101
    %262 = vmatprep.subr.mxu0 0.0
    %263 = vmatpush1.msra.mxu0 %v102
    %264 = vmatprep.subr.mxu0 0.0
    %265 = vmatpush1.msra.mxu0 %v103
    %266 = vmatprep.subr.mxu0 0.0
    %267 = vmatpush1.msra.mxu0 %v104
    %268 = vmatprep.subr.mxu0 0.0
    %269 = vmatpush1.msra.mxu0 %v105
    %270 = vmatprep.subr.mxu0 0.0
    %271 = vmatpush1.msra.mxu0 %v106
    %272 = vmatprep.subr.mxu0 0.0
    %273 = vmatpush1.msra.mxu0 %v107
    %274 = vmatprep.subr.mxu0 0.0
    %275 = vmatpush1.msra.mxu0 %v108
    %276 = vmatprep.subr.mxu0 0.0
    %277 = vmatpush1.msra.mxu0 %v109
    %278 = vmatprep.subr.mxu0 0.0
    %279 = vmatpush1.msra.mxu0 %v110
    %280 = vmatprep.subr.mxu0 0.0
    %281 = vmatpush1.msra.mxu0 %v111
    %282 = vmatprep.subr.mxu0 0.0
    %283 = vmatpush1.msra.mxu0 %v112
    %284 = vmatprep.subr.mxu0 0.0
    %285 = vmatpush1.msra.mxu0 %v113
    %286 = vmatprep.subr.mxu0 0.0
    %287 = vmatpush1.msra.mxu0 %v114
    %288 = vmatprep.subr.mxu0 0.0
    %289 = vmatpush1.msra.mxu0 %v115
    %290 = vmatprep.subr.mxu0 0.0
    %291 = vmatpush1.msra.mxu0 %v116
    %292 = vmatprep.subr.mxu0 0.0
    %293 = vmatpush1.msra.mxu0 %v117
    %294 = vmatprep.subr.mxu0 0.0
    %295 = vmatpush1.msra.mxu0 %v118
    %296 = vmatprep.subr.mxu0 0.0
    %297 = vmatpush1.msra.mxu0 %v119
    %298 = vmatprep.subr.mxu0 0.0
    %299 = vmatpush1.msra.mxu0 %v120
    %300 = vmatprep.subr.mxu0 0.0
    %301 = vmatpush1.msra.mxu0 %v121
    %302 = vmatprep.subr.mxu0 0.0
    %303 = vmatpush1.msra.mxu0 %v122
    %304 = vmatprep.subr.mxu0 0.0
    %305 = vmatpush1.msra.mxu0 %v123
    %306 = vmatprep.subr.mxu0 0.0
    %307 = vmatpush1.msra.mxu0 %v124
    %308 = vmatprep.subr.mxu0 0.0
    %309 = vmatpush1.msra.mxu0 %v125
    %310 = vmatprep.subr.mxu0 0.0
    %311 = vmatpush1.msra.mxu0 %v126
    %312 = vmatprep.subr.mxu0 0.0
    %313 = vmatpush1.msra.mxu0 %v127
    %314 = vmatprep.subr.mxu0 0.0
    %315 = vmatpush1.msra.mxu0 %v128
    %316 = vmatprep.subr.mxu0 0.0
    %317 = vmatpush1.msra.mxu0 %v129
    %318 = vmatprep.subr.mxu0 0.0
    %319 = vmatpush1.msra.mxu0 %v130
    %320 = vmatprep.mubr.f32.mxu0 %v63
    %321 = vmatmul.mubr.f32.gmra.mrb[0].mxu0 %v62
    %v322 = vpop.f32.mrb[0].mxu0
    %v323 = vadd.f32 %v253, %v322
    %v324 = vpop.f32.mrb[0].mxu0
    %325 = vdwg.mxu0
    %326 = vmatprep.subr.mxu0 0.0
    %327 = vmatpush1.msra.mxu0 %v131
    %328 = vmatprep.subr.mxu0 0.0
    %329 = vmatpush1.msra.mxu0 %v132
    %330 = vmatprep.subr.mxu0 0.0
    %331 = vmatpush1.msra.mxu0 %v133
    %332 = vmatprep.subr.mxu0 0.0
    %333 = vmatpush1.msra.mxu0 %v134
    %334 = vmatprep.subr.mxu0 0.0
    %335 = vmatpush1.msra.mxu0 %v135
    %336 = vmatprep.subr.mxu0 0.0
    %337 = vmatpush1.msra.mxu0 %v136
    %338 = vmatprep.subr.mxu0 0.0
    %339 = vmatpush1.msra.mxu0 %v137
    %340 = vmatprep.subr.mxu0 0.0
    %341 = vmatpush1.msra.mxu0 %v138
    %342 = vmatprep.subr.mxu0 0.0
    %343 = vmatpush1.msra.mxu0 %v139
    %344 = vmatprep.subr.mxu0 0.0
    %345 = vmatpush1.msra.mxu0 %v140
    %346 = vmatprep.subr.mxu0 0.0
    %347 = vmatpush1.msra.mxu0 %v141
    %348 = vmatprep.subr.mxu0 0.0
    %349 = vmatpush1.msra.mxu0 %v142
    %350 = vmatprep.subr.mxu0 0.0
    %351 = vmatpush1.msra.mxu0 %v143
    %352 = vmatprep.subr.mxu0 0.0
    %353 = vmatpush1.msra.mxu0 %v144
    %354 = vmatprep.subr.mxu0 0.0
    %355 = vmatpush1.msra.mxu0 %v145
    %356 = vmatprep.subr.mxu0 0.0
    %357 = vmatpush1.msra.mxu0 %v146
    %358 = vmatprep.subr.mxu0 0.0
    %359 = vmatpush1.msra.mxu0 %v147
    %360 = vmatprep.subr.mxu0 0.0
    %361 = vmatpush1.msra.mxu0 %v148
    %362 = vmatprep.subr.mxu0 0.0
    %363 = vmatpush1.msra.mxu0 %v149
    %364 = vmatprep.subr.mxu0 0.0
    %365 = vmatpush1.msra.mxu0 %v150
    %366 = vmatprep.subr.mxu0 0.0
    %367 = vmatpush1.msra.mxu0 %v151
    %368 = vmatprep.subr.mxu0 0.0
    %369 = vmatpush1.msra.mxu0 %v152
    %370 = vmatprep.subr.mxu0 0.0
    %371 = vmatpush1.msra.mxu0 %v153
    %372 = vmatprep.subr.mxu0 0.0
    %373 = vmatpush1.msra.mxu0 %v154
    %374 = vmatprep.subr.mxu0 0.0
    %375 = vmatpush1.msra.mxu0 %v155
    %376 = vmatprep.subr.mxu0 0.0
    %377 = vmatpush1.msra.mxu0 %v156
    %378 = vmatprep.subr.mxu0 0.0
    %379 = vmatpush1.msra.mxu0 %v157
    %380 = vmatprep.subr.mxu0 0.0
    %381 = vmatpush1.msra.mxu0 %v158
    %382 = vmatprep.subr.mxu0 0.0
    %383 = vmatpush1.msra.mxu0 %v159
    %384 = vmatprep.subr.mxu0 0.0
    %385 = vmatpush1.msra.mxu0 %v160
    %386 = vmatprep.subr.mxu0 0.0
    %387 = vmatpush1.msra.mxu0 %v161
    %388 = vmatprep.subr.mxu0 0.0
    %389 = vmatpush1.msra.mxu0 %v162
    %390 = vmatprep.mubr.f32.mxu0 %v65
    %391 = vmatmul.mubr.f32.gmra.mrb[0].mxu0 %v64
    %v392 = vpop.f32.mrb[0].mxu0
    %v393 = vadd.f32 %v323, %v392
    %v394 = vpop.f32.mrb[0].mxu0
    %395 = vdwg.mxu0
    %396 = vmatprep.subr.mxu0 0.0
    %397 = vmatpush1.msra.mxu0 %v163
    %398 = vmatprep.subr.mxu0 0.0
    %399 = vmatpush1.msra.mxu0 %v164
    %400 = vmatprep.subr.mxu0 0.0
    %401 = vmatpush1.msra.mxu0 %v165
    %402 = vmatprep.subr.mxu0 0.0
    %403 = vmatpush1.msra.mxu0 %v166
    %404 = vmatprep.subr.mxu0 0.0
    %405 = vmatpush1.msra.mxu0 %v167
    %406 = vmatprep.subr.mxu0 0.0
    %407 = vmatpush1.msra.mxu0 %v168
    %408 = vmatprep.subr.mxu0 0.0
    %409 = vmatpush1.msra.mxu0 %v169
    %410 = vmatprep.subr.mxu0 0.0
    %411 = vmatpush1.msra.mxu0 %v170
    %412 = vmatprep.subr.mxu0 0.0
    %413 = vmatpush1.msra.mxu0 %v171
    %414 = vmatprep.subr.mxu0 0.0
    %415 = vmatpush1.msra.mxu0 %v172
    %416 = vmatprep.subr.mxu0 0.0
    %417 = vmatpush1.msra.mxu0 %v173
    %418 = vmatprep.subr.mxu0 0.0
    %419 = vmatpush1.msra.mxu0 %v174
    %420 = vmatprep.subr.mxu0 0.0
    %421 = vmatpush1.msra.mxu0 %v175
    %422 = vmatprep.subr.mxu0 0.0
    %423 = vmatpush1.msra.mxu0 %v176
    %424 = vmatprep.subr.mxu0 0.0
    %425 = vmatpush1.msra.mxu0 %v177
    %426 = vmatprep.subr.mxu0 0.0
    %427 = vmatpush1.msra.mxu0 %v178
    %428 = vmatprep.subr.mxu0 0.0
    %429 = vmatpush1.msra.mxu0 0.0
    %430 = vmatprep.subr.mxu0 0.0
    %431 = vmatpush1.msra.mxu0 0.0
    %432 = vmatprep.subr.mxu0 0.0
    %433 = vmatpush1.msra.mxu0 0.0
    %434 = vmatprep.subr.mxu0 0.0
    %435 = vmatpush1.msra.mxu0 0.0
    %436 = vmatprep.subr.mxu0 0.0
    %437 = vmatpush1.msra.mxu0 0.0
    %438 = vmatprep.subr.mxu0 0.0
    %439 = vmatpush1.msra.mxu0 0.0
    %440 = vmatprep.subr.mxu0 0.0
    %441 = vmatpush1.msra.mxu0 0.0
    %442 = vmatprep.subr.mxu0 0.0
    %443 = vmatpush1.msra.mxu0 0.0
    %444 = vmatprep.subr.mxu0 0.0
    %445 = vmatpush1.msra.mxu0 0.0
    %446 = vmatprep.subr.mxu0 0.0
    %447 = vmatpush1.msra.mxu0 0.0
    %448 = vmatprep.subr.mxu0 0.0
    %449 = vmatpush1.msra.mxu0 0.0
    %450 = vmatprep.subr.mxu0 0.0
    %451 = vmatpush1.msra.mxu0 0.0
    %452 = vmatprep.subr.mxu0 0.0
    %453 = vmatpush1.msra.mxu0 0.0
    %454 = vmatprep.subr.mxu0 0.0
    %455 = vmatpush1.msra.mxu0 0.0
    %456 = vmatprep.subr.mxu0 0.0
    %457 = vmatpush1.msra.mxu0 0.0
    %458 = vmatprep.subr.mxu0 0.0
    %459 = vmatpush1.msra.mxu0 0.0
    %460 = vmatprep.mubr.f32.mxu0 0.0
    %461 = vmatmul.mubr.f32.gmra.mrb[0].mxu0 %v66
    %v462 = vpop.f32.mrb[0].mxu0
    %v463 = vadd.f32 %v393, %v462
    %v464 = vpop.f32.mrb[0].mxu0
    %465 = vdwg.mxu0
    %v466 = vmax.f32 %v463, 0.0
    %v467 = vld [vmem:[#allocation7] sm:$0xff]
    %v468 = vld [vmem:[#allocation7 + $0x8] sm:$0xff]
    %v469 = vld [vmem:[#allocation7 + $0x10] sm:$0xff]
    %v470 = vld [vmem:[#allocation7 + $0x18] sm:$0xff]
    %v471 = vld [vmem:[#allocation7 + $0x20] sm:$0xff]
    %v472 = vld [vmem:[#allocation7 + $0x28] sm:$0xff]
    %v473 = vld [vmem:[#allocation7 + $0x30] sm:$0xff]
    %v474 = vld [vmem:[#allocation7 + $0x38] sm:$0xff]
    %v475 = vld [vmem:[#allocation7 + $0x40] sm:$0xff]
    %v476 = vld [vmem:[#allocation7 + $0x48] sm:$0xff]
    %v477 = vld [vmem:[#allocation7 + $0x50] sm:$0xff]
    %v478 = vld [vmem:[#allocation7 + $0x58] sm:$0xff]
    %v479 = vld [vmem:[#allocation7 + $0x60] sm:$0xff]
    %v480 = vld [vmem:[#allocation7 + $0x68] sm:$0xff]
    %v481 = vld [vmem:[#allocation7 + $0x70] sm:$0xff]
    %v482 = vld [vmem:[#allocation7 + $0x78] sm:$0xff]
    %v483 = vld [vmem:[%s4] sm:$0x1]
    %v485 = vlaneseq
    %v486 = vshrl.u32 %v485, 7
    %v487 = vsub.s32 0, %v486
    %v488 = vrot.slane %v483, %v487
    %490 = vmatprep.subr.mxu0 0.0
    %491 = vmatpush1.msra.mxu0 %v467
    %492 = vmatprep.subr.mxu0 0.0
    %493 = vmatpush1.msra.mxu0 %v468
    %494 = vmatprep.subr.mxu0 0.0
    %495 = vmatpush1.msra.mxu0 %v469
    %496 = vmatprep.subr.mxu0 0.0
    %497 = vmatpush1.msra.mxu0 %v470
    %498 = vmatprep.subr.mxu0 0.0
    %499 = vmatpush1.msra.mxu0 %v471
    %500 = vmatprep.subr.mxu0 0.0
    %501 = vmatpush1.msra.mxu0 %v472
    %502 = vmatprep.subr.mxu0 0.0
    %503 = vmatpush1.msra.mxu0 %v473
    %504 = vmatprep.subr.mxu0 0.0
    %505 = vmatpush1.msra.mxu0 %v474
    %506 = vmatprep.subr.mxu0 0.0
    %507 = vmatpush1.msra.mxu0 %v475
    %508 = vmatprep.subr.mxu0 0.0
    %509 = vmatpush1.msra.mxu0 %v476
    %510 = vmatprep.subr.mxu0 0.0
    %511 = vmatpush1.msra.mxu0 %v477
    %512 = vmatprep.subr.mxu0 0.0
    %513 = vmatpush1.msra.mxu0 %v478
    %514 = vmatprep.subr.mxu0 0.0
    %515 = vmatpush1.msra.mxu0 %v479
    %516 = vmatprep.subr.mxu0 0.0
    %517 = vmatpush1.msra.mxu0 %v480
    %518 = vmatprep.subr.mxu0 0.0
    %519 = vmatpush1.msra.mxu0 %v481
    %520 = vmatprep.subr.mxu0 0.0
    %521 = vmatpush1.msra.mxu0 %v482
    %522 = vmatprep.subr.mxu0 0.0
    %523 = vmatpush1.msra.mxu0 0.0
    %524 = vmatprep.subr.mxu0 0.0
    %525 = vmatpush1.msra.mxu0 0.0
    %526 = vmatprep.subr.mxu0 0.0
    %527 = vmatpush1.msra.mxu0 0.0
    %528 = vmatprep.subr.mxu0 0.0
    %529 = vmatpush1.msra.mxu0 0.0
    %530 = vmatprep.subr.mxu0 0.0
    %531 = vmatpush1.msra.mxu0 0.0
    %532 = vmatprep.subr.mxu0 0.0
    %533 = vmatpush1.msra.mxu0 0.0
    %534 = vmatprep.subr.mxu0 0.0
    %535 = vmatpush1.msra.mxu0 0.0
    %536 = vmatprep.subr.mxu0 0.0
    %537 = vmatpush1.msra.mxu0 0.0
    %538 = vmatprep.subr.mxu0 0.0
    %539 = vmatpush1.msra.mxu0 0.0
    %540 = vmatprep.subr.mxu0 0.0
    %541 = vmatpush1.msra.mxu0 0.0
    %542 = vmatprep.subr.mxu0 0.0
    %543 = vmatpush1.msra.mxu0 0.0
    %544 = vmatprep.subr.mxu0 0.0
    %545 = vmatpush1.msra.mxu0 0.0
    %546 = vmatprep.subr.mxu0 0.0
    %547 = vmatpush1.msra.mxu0 0.0
    %548 = vmatprep.subr.mxu0 0.0
    %549 = vmatpush1.msra.mxu0 0.0
    %550 = vmatprep.subr.mxu0 0.0
    %551 = vmatpush1.msra.mxu0 0.0
    %552 = vmatprep.subr.mxu0 0.0
    %553 = vmatpush1.msra.mxu0 0.0
    %554 = vmatprep.mubr.f32.mxu0 0.0
    %555 = vmatmul.mubr.f32.gmra.mrb[0].mxu0 %v466
    %v556 = vpop.f32.mrb[0].mxu0
    %v557 = vadd.f32 %v488, %v556
    %v558 = vpop.f32.mrb[0].mxu0
    %559 = vdwg.mxu0
    %560 = vst [vmem:[#allocation8] sm:$0xff] %v557
    // Predicated region
    $region34: #{tpu_custom_call.1} parent=1 // pred_check
      _
    $region35: #{tpu_custom_call.1} parent=1 // pred_check_branch
      %562 = sbr.rel (0) target = $region37
    $region36: #{tpu_custom_call.1} parent=1 // pred_region
      %s564 = ssub.s32 128, 128
      %565 = vsyncadd [#allocation4], %s564
      %s567 = sshll.u32 [#allocation8], 4
      %s568 = int_to_ptr.vmem [resolvable:$true] %s567
      %570 = dma.vmem_to_hbm [thread:$0]  %s568, 128, %s5, [#allocation4]
    $region37: #{tpu_custom_call.1} parent=1 // pred_fallthru
      _
    // Predicated region
    $region38: #{tpu_custom_call.1} parent=1 // pred_check
      _
    $region39: #{tpu_custom_call.1} parent=1 // pred_check_branch
      %572 = sbr.rel (0) target = $region41
    $region40: #{tpu_custom_call.1} parent=1 // pred_region
      %573 = dma.done [#allocation4], 128
    $region41: #{tpu_custom_call.1} parent=1 // pred_fallthru
      _
    %574 = vsyncpa [#allocation3], 1
    %575 = vsyncpa [#allocation6], 1
    %576 = vsyncpa [#allocation4], 1

</llo_original>
